<compile_context>
chip_gen: v7x
topology: tpu7x:2x2x1
jax: 0.10.0
libtpu: 0.0.40
codegen_flags: <defaults>
</compile_context>

<pallas_src>
import jax
import jax.numpy as jnp
from jax.experimental import pallas as pl
from jax.experimental.pallas import tpu as pltpu

_TARGET_BLOCK_BYTES = 4 * 1024 * 1024          # ~4 MiB blocks
_LANE_CANDIDATES = (1024, 512, 256, 128)       # lane-dense widths -> unmasked vst


def h_swish_kernel(x_ref, o_ref):
    # HBM-bound: VALU/EUP slots are nearly idle, so upcast to f32, compute,
    # cast back.  relu6(x + 3) == clip(x + 3, 0, 6).
    x = x_ref[...].astype(jnp.float32)
    o_ref[...] = (x * jnp.clip(x + 3.0, 0.0, 6.0) / 6.0).astype(o_ref.dtype)


def _round_up(x, m):
    return ((x + m - 1) // m) * m


def _sublane_multiple(itemsize):
    # Sub-32-bit dtypes pack along sublanes: (8,128) f32, (16,128) bf16, (32,128) int8.
    return {4: 8, 2: 16, 1: 32}.get(itemsize, 8)


def _tiling(rows, lane, itemsize):
    sub = _sublane_multiple(itemsize)
    target_rows = max(sub, (_TARGET_BLOCK_BYTES // (lane * itemsize)) // sub * sub)
    block_rows = min(target_rows, _round_up(rows, sub))
    # Guarantee >= 2 grid steps where possible so the "parallel" axis shards
    # across both v7x TensorCores.
    while pl.cdiv(rows, block_rows) < 2 and block_rows > sub:
        block_rows = max(sub, _round_up(block_rows // 2, sub))
    if block_rows > rows:
        # Tiny tensor: block dim equal to the full array extent is always legal.
        block_rows = rows
    return block_rows, pl.cdiv(rows, block_rows)


def h_swish_forward(x):
    orig_shape = x.shape
    dtype = x.dtype
    itemsize = jnp.dtype(dtype).itemsize

    n = x.size
    x_flat = x.reshape(-1)

    lane = next((l for l in _LANE_CANDIDATES if n % l == 0), None)
    if lane is None:
        # Rare ragged fallback (n not a multiple of 128).  h_swish(0) == 0 so
        # zero padding is numerically safe.
        # TODO(synk): mask the tail inside the kernel instead to avoid the
        # extra pad/slice HBM round trips (never triggers for DynamicHead
        # NCHW inputs where H*W is a multiple of 128).
        lane = 128
        n_padded = _round_up(n, lane)
        x_flat = jnp.pad(x_flat, (0, n_padded - n))
    else:
        n_padded = n

    rows = n_padded // lane
    x2d = x_flat.reshape(rows, lane)

    block_rows, grid = _tiling(rows, lane, itemsize)
    block_bytes = block_rows * lane * itemsize
    # 2x double-buffered input + 2x double-buffered output + slack.
    vmem_limit = max(4 * block_bytes + (4 << 20), 16 << 20)

    out2d = pl.pallas_call(
        h_swish_kernel,
        out_shape=jax.ShapeDtypeStruct((rows, lane), dtype),
        grid_spec=pltpu.PrefetchScalarGridSpec(
            num_scalar_prefetch=0,
            grid=(grid,),
            # Note: pipeline_mode=pl.Buffered(3) on the input is a possible
            # 0-5% win on v7x; left at the default depth of 2 here.
            in_specs=[pl.BlockSpec((block_rows, lane), lambda i: (i, 0))],
            out_specs=pl.BlockSpec((block_rows, lane), lambda i: (i, 0)),
        ),
        compiler_params=pltpu.CompilerParams(
            dimension_semantics=("parallel",),
            vmem_limit_bytes=vmem_limit,
        ),
    )(x2d)

    out_flat = out2d.reshape(-1)
    if n_padded != n:
        out_flat = out_flat[:n]
    return out_flat.reshape(orig_shape)


def h_swish_reference(x):
    xf = x.astype(jnp.float32)
    return (xf * jnp.clip(xf + 3.0, 0.0, 6.0) / 6.0).astype(x.dtype)


if __name__ == "__main__":
    # Small NCHW shape consistent with DynamicHead usage.
    B, C, H, W = 2, 4, 16, 16
    key = jax.random.PRNGKey(0)
    x = jax.random.normal(key, (B, C, H, W), dtype=jnp.float32)

    out = h_swish_forward(x)
    out = jax.block_until_ready(out)

    ref = h_swish_reference(x)
    assert out.shape == (B, C, H, W)
    assert jnp.max(jnp.abs(out - ref)) < 1e-5, "mismatch vs reference"

    print("KERNEL_OK")
</pallas_src>

<mosaic_0001>
module attributes {stable_mosaic.version = 11 : i64} {
  func.func @h_swish_kernel(%arg0: i32, %arg1: memref<2x1024xf32, #tpu.memory_space<vmem>>, %arg2: memref<2x1024xf32, #tpu.memory_space<vmem>>) attributes {dimension_semantics = [#tpu.dimension_semantics<parallel>], iteration_bounds = array<i64: 1>, scalar_prefetch = 0 : i64, scratch_operands = 0 : i64, tpu.core_type = #tpu.core_type<tc>, window_params = [{transform_indices = @transform_0, window_bounds = array<i64: 2, 1024>}, {transform_indices = @transform_1, window_bounds = array<i64: 2, 1024>}]} {
    %c0 = arith.constant 0 : index
    %c0_0 = arith.constant 0 : index
    %0 = vector.load %arg1[%c0, %c0_0] : memref<2x1024xf32, #tpu.memory_space<vmem>>, vector<2x1024xf32>
    %cst = arith.constant 3.000000e+00 : f32
    %1 = vector.broadcast %cst : f32 to vector<2x1024xf32>
    %2 = arith.addf %0, %1 : vector<2x1024xf32>
    %cst_1 = arith.constant 0.000000e+00 : f32
    %cst_2 = arith.constant 6.000000e+00 : f32
    %3 = vector.broadcast %cst_1 : f32 to vector<2x1024xf32>
    %4 = arith.maximumf %3, %2 : vector<2x1024xf32>
    %5 = vector.broadcast %cst_2 : f32 to vector<2x1024xf32>
    %6 = arith.minimumf %5, %4 : vector<2x1024xf32>
    %7 = arith.mulf %0, %6 : vector<2x1024xf32>
    %cst_3 = arith.constant 6.000000e+00 : f32
    %8 = vector.broadcast %cst_3 : f32 to vector<2x1024xf32>
    %9 = arith.divf %7, %8 : vector<2x1024xf32>
    %c0_4 = arith.constant 0 : index
    %c0_5 = arith.constant 0 : index
    %10 = vector.load %arg2[%c0_4, %c0_5] : memref<2x1024xf32, #tpu.memory_space<vmem>>, vector<2x1024xf32>
    tpu.vector_store %arg2[%c0_4, %c0_5], %9 {strides = array<i32>} : memref<2x1024xf32, #tpu.memory_space<vmem>>, vector<2x1024xf32>,
    return
  }
  func.func @transform_0(%arg0: i32) -> (i32, i32) {
    %c0_i32 = arith.constant 0 : i32
    %c0_i32_0 = arith.constant 0 : i32
    return %arg0, %c0_i32 : i32, i32
  }
  func.func @transform_1(%arg0: i32) -> (i32, i32) {
    %c0_i32 = arith.constant 0 : i32
    %c0_i32_0 = arith.constant 0 : i32
    return %arg0, %c0_i32 : i32, i32
  }
}

</mosaic_0001>

<llo_original>
// kernel: tpu_custom_call.1
$region0: #{tpu_custom_call.1}
  #allocation0 [shape = 'u32[]', space=smem, size = 0x4, offset = 0x4, fixed_abs, tag = 'smem constant byte address 0x4 - core index']
  #allocation1 [shape = 'u32[144,128]{1,0:T(1,128)}', space=vmem, size = 0x12000, scoped, tag = 'internal scratch']
  %s0 = inlined_call_operand.hbm [shape: f32[2,1024], index: 0, kind: input, shape index: {}]
  %s1 = inlined_call_operand.hbm [shape: f32[2,1024], index: 1, kind: output, shape index: {}]
  %s2 = sld [smem:[#allocation0]]
  $region18: #{tpu_custom_call.1} parent=0
    _
  %s4 = ssub.s32 1, %s2
  %s5 = scalar_select 0, %s4, %s2
  $region1: #{tpu_custom_call.1} parent=0
    #allocation2 [shape = 'u8[8192]{0}', space=vmem, size = 0x2000, scoped, tag = 'input window, operand 0, single buffered']
    #allocation3 [shape = 's32[1]{0}', space=sflag, size = 0x4, scoped, tag = 'scoped memory for tpu_custom_call.1']
    #allocation4 [shape = 's32[1]{0}', space=sflag, size = 0x4, scoped, tag = 'scoped memory for tpu_custom_call.1']
    #allocation5 [shape = 'u8[8192]{0}', space=vmem, size = 0x2000, scoped, tag = 'output window, operand 0, single buffered']
    %6 = vsyncpa [#allocation3], 0
    %7 = vsyncpa [#allocation4], 0
    // Predicated region
    $region2: #{tpu_custom_call.1} parent=1 // pred_check
      _
    $region3: #{tpu_custom_call.1} parent=1 // pred_check_branch
      %9 = sbr.rel (0) target = $region5
    $region4: #{tpu_custom_call.1} parent=1 // pred_region
      %s11 = ssub.s32 256, 256
      %12 = vsyncadd [#allocation3], %s11
      %s14 = sshll.u32 [#allocation2], 4
      %s15 = int_to_ptr.vmem [resolvable:$true] %s14
      %17 = dma.hbm_to_vmem [thread:$0]  %s0, 256, %s15, [#allocation3]
    $region5: #{tpu_custom_call.1} parent=1 // pred_fallthru
      _
    // Predicated region
    $region6: #{tpu_custom_call.1} parent=1 // pred_check
      _
    $region7: #{tpu_custom_call.1} parent=1 // pred_check_branch
      %19 = sbr.rel (0) target = $region9
    $region8: #{tpu_custom_call.1} parent=1 // pred_region
      %20 = dma.done [#allocation3], 256
    $region9: #{tpu_custom_call.1} parent=1 // pred_fallthru
      _
    %v21 = vld [vmem:[#allocation2] sm:$0xff]
    %v22 = vld [vmem:[#allocation2 + $0x8] sm:$0xff]
    %v23 = vadd.f32 %v21, 3.0
    %v24 = vadd.f32 %v22, 3.0
    %v25 = vmax.f32 %v23, 0.0
    %v26 = vmax.f32 %v24, 0.0
    %v27 = vmin.f32 %v25, 6.0
    %v28 = vmin.f32 %v26, 6.0
    %v29 = vmul.f32 %v21, %v27
    %v30 = vmul.f32 %v22, %v28
    %v31 = vrcp.pop 6.0
    %v32 = vmul.f32 %v29, %v31
    %v33 = vmul.f32 %v30, %v31
    %34 = vst [vmem:[#allocation5] sm:$0xff] %v32
    %35 = vst [vmem:[#allocation5 + $0x8] sm:$0xff] %v33
    // Predicated region
    $region10: #{tpu_custom_call.1} parent=1 // pred_check
      _
    $region11: #{tpu_custom_call.1} parent=1 // pred_check_branch
      %37 = sbr.rel (0) target = $region13
    $region12: #{tpu_custom_call.1} parent=1 // pred_region
      %s39 = ssub.s32 256, 256
      %40 = vsyncadd [#allocation4], %s39
      %s42 = sshll.u32 [#allocation5], 4
      %s43 = int_to_ptr.vmem [resolvable:$true] %s42
      %45 = dma.vmem_to_hbm [thread:$0]  %s43, 256, %s1, [#allocation4]
    $region13: #{tpu_custom_call.1} parent=1 // pred_fallthru
      _
    // Predicated region
    $region14: #{tpu_custom_call.1} parent=1 // pred_check
      _
    $region15: #{tpu_custom_call.1} parent=1 // pred_check_branch
      %47 = sbr.rel (0) target = $region17
    $region16: #{tpu_custom_call.1} parent=1 // pred_region
      %48 = dma.done [#allocation4], 256
    $region17: #{tpu_custom_call.1} parent=1 // pred_fallthru
      _
    %49 = vsyncpa [#allocation3], 1
    %50 = vsyncpa [#allocation4], 1

</llo_original>
